<compile_context>
chip_gen: v7x
topology: tpu7x:2x2x1
jax: 0.10.0
libtpu: 0.0.40
codegen_flags: <defaults>
</compile_context>

<pallas_src>
import jax
import jax.numpy as jnp
from jax import lax
from jax.experimental import pallas as pl
from jax.experimental.pallas import tpu as pltpu


def make_temporal_block_kernel(L, C_in, C_out, K, dilation, b_tile, has_downsample):
    """Builds the Pallas kernel body (closure over static shape params)."""
    d = dilation

    def causal_tap_slab(x2d):
        """x2d: (rows, b_tile*L).  Returns (K*rows, b_tile*L): tap k is x shifted
        right (in time) by (K-1-k)*d with zero fill, so that
        W_flat @ slab == causal dilated conv (conv + chomp of the reference)."""
        rows, BL = x2d.shape
        need_mask = b_tile > 1  # zero-fill must not leak across batch segments
        if need_mask:
            tpos = jnp.tile(lax.broadcasted_iota(jnp.int32, (rows, L), 1),
                            (1, b_tile))
        taps = []
        for k in range(K):
            s = (K - 1 - k) * d
            if s == 0:
                taps.append(x2d)
                continue
            shifted = jnp.concatenate(
                [jnp.zeros((rows, s), x2d.dtype), x2d[:, :BL - s]], axis=1)
            if need_mask:
                shifted = jnp.where(tpos < s, jnp.zeros_like(shifted), shifted)
            taps.append(shifted)
        return jnp.concatenate(taps, axis=0)

    def kernel(x_ref, w1_ref, b1_ref, w2_ref, b2_ref, *rest):
        if has_downsample:
            wd_ref, bd_ref, o_ref = rest
        else:
            (o_ref,) = rest
        mdt = w1_ref.dtype  # MXU input dtype (f32 default, bf16 optional)

        # Concatenate the batch tile along the lane (time) axis so each conv is
        # a single matmul with N = b_tile * L.
        if b_tile == 1:
            x_cat = x_ref[0]                                   # (C_in, L)
        else:
            x_cat = jnp.concatenate([x_ref[b] for b in range(b_tile)], axis=1)

        # ---- conv1 (K taps fused into contraction) + ReLU ----------------
        slab1 = causal_tap_slab(x_cat)                         # (K*C_in, BL)
        y1 = jnp.dot(w1_ref[...], slab1.astype(mdt),
                     preferred_element_type=jnp.float32) + b1_ref[...]
        y1 = jnp.maximum(y1, 0.0)        # ReLU; dropout == identity (eval)

        # ---- conv2 (K taps fused into contraction) + ReLU ----------------
        slab2 = causal_tap_slab(y1)                            # (K*C_out, BL)
        y2 = jnp.dot(w2_ref[...], slab2.astype(mdt),
                     preferred_element_type=jnp.float32) + b2_ref[...]
        y2 = jnp.maximum(y2, 0.0)        # ReLU; dropout == identity (eval)

        # ---- residual path ------------------------------------------------
        if has_downsample:
            res = jnp.dot(wd_ref[...], x_cat.astype(mdt),
                          preferred_element_type=jnp.float32) + bd_ref[...]
        else:
            res = x_cat                  # C_in == C_out in this case

        out = jnp.maximum(y2 + res, 0.0)                       # (C_out, BL)

        if b_tile == 1:
            o_ref[0] = out.astype(o_ref.dtype)
        else:
            for b in range(b_tile):
                o_ref[b] = out[:, b * L:(b + 1) * L].astype(o_ref.dtype)

    return kernel


def temporal_block_forward(x_ncl, params, *, kernel_size, dilation, padding,
                           b_tile=1, use_bf16=False):
    """x_ncl: (N, C_in, L) float32 in the PyTorch NCL layout.
    Returns (N, C_out, L) float32."""
    w1, b1, w2, b2, wd, bd = params
    N, C_in, L = x_ncl.shape
    C_out = w1.shape[0]
    K = kernel_size
    assert padding == (K - 1) * dilation, "standard causal TCN padding required"
    assert N % b_tile == 0, "batch must be divisible by b_tile"
    has_ds = wd is not None

    # Optional bf16 MXU inputs (2x MXU rate + half the weight DMA on v6e/v7x);
    # kept off by default so the 1e-4 tolerance check passes exactly.
    wdt = jnp.bfloat16 if use_bf16 else jnp.float32

    # Fold the K taps into the contraction dim: W_flat[o, k*C + c] = w[o, c, k]
    w1_f = jnp.transpose(w1, (0, 2, 1)).reshape(C_out, K * C_in).astype(wdt)
    w2_f = jnp.transpose(w2, (0, 2, 1)).reshape(C_out, K * C_out).astype(wdt)
    b1_k = b1.reshape(C_out, 1).astype(jnp.float32)
    b2_k = b2.reshape(C_out, 1).astype(jnp.float32)

    args = [x_ncl.astype(jnp.float32), w1_f, b1_k, w2_f, b2_k]
    in_specs = [
        pl.BlockSpec((b_tile, C_in, L), lambda n: (n, 0, 0)),      # x (NCL, unpadded)
        pl.BlockSpec((C_out, K * C_in), lambda n: (0, 0)),         # w1 (fused taps)
        pl.BlockSpec((C_out, 1), lambda n: (0, 0)),                # b1
        pl.BlockSpec((C_out, K * C_out), lambda n: (0, 0)),        # w2 (fused taps)
        pl.BlockSpec((C_out, 1), lambda n: (0, 0)),                # b2
    ]
    if has_ds:  # only DMA downsample params when they exist
        args += [wd[:, :, 0].astype(wdt),
                 bd.reshape(C_out, 1).astype(jnp.float32)]
        in_specs += [pl.BlockSpec((C_out, C_in), lambda n: (0, 0)),
                     pl.BlockSpec((C_out, 1), lambda n: (0, 0))]

    kernel = make_temporal_block_kernel(L, C_in, C_out, K, dilation, b_tile, has_ds)

    flops = 2 * N * L * (K * C_in * C_out + K * C_out * C_out
                         + (C_in * C_out if has_ds else 0))
    bytes_accessed = 4 * N * L * (C_in + C_out) + sum(
        int(a.size) * a.dtype.itemsize for a in args[1:])

    # NOTE: for large L / C, add a time-tiled grid with a (K-1)*d halo and raise
    # pltpu.CompilerParams(vmem_limit_bytes=...) (especially on v7x, 64 MiB VMEM).
    return pl.pallas_call(
        kernel,
        out_shape=jax.ShapeDtypeStruct((N, C_out, L), jnp.float32),
        grid_spec=pltpu.PrefetchScalarGridSpec(
            num_scalar_prefetch=0,
            grid=(N // b_tile,),
            in_specs=in_specs,
            out_specs=pl.BlockSpec((b_tile, C_out, L), lambda n: (n, 0, 0)),
        ),
        compiler_params=pltpu.CompilerParams(
            dimension_semantics=("parallel",)),   # independent per batch tile
        cost_estimate=pl.CostEstimate(flops=flops, transcendentals=0,
                                      bytes_accessed=bytes_accessed),
    )(*args)


# ---------------------------------------------------------------------------
# pure-JAX reference (mirrors the PyTorch forward) for validation
# ---------------------------------------------------------------------------
def reference_forward(x_ncl, params, *, kernel_size, dilation, padding):
    w1, b1, w2, b2, wd, bd = params
    dn = ("NCH", "OIH", "NCH")
    p, d = padding, dilation

    def conv(x, w, b):
        y = lax.conv_general_dilated(x, w, window_strides=(1,), padding=[(p, p)],
                                     rhs_dilation=(d,), dimension_numbers=dn)
        return y + b[None, :, None]

    y = conv(x_ncl, w1, b1)[:, :, :-p]
    y = jnp.maximum(y, 0.0)
    y = conv(y, w2, b2)[:, :, :-p]
    y = jnp.maximum(y, 0.0)
    if wd is not None:
        res = lax.conv_general_dilated(x_ncl, wd, window_strides=(1,), padding=[(0, 0)],
                                       dimension_numbers=dn) + bd[None, :, None]
    else:
        res = x_ncl
    return jnp.maximum(y + res, 0.0)


def weight_norm_effective(v, g):
    """weight_norm(dim=0): w = g * v / ||v|| with norm over all dims except 0."""
    norm = jnp.sqrt(jnp.sum(v * v, axis=(1, 2), keepdims=True))
    return g.reshape(-1, 1, 1) * v / norm


if __name__ == "__main__":
    # module hyper-params (standard TCN block)
    n_inputs, n_outputs = 4, 8
    kernel_size, stride, dilation = 3, 1, 2
    padding = (kernel_size - 1) * dilation   # causal padding -> chomp
    N, L = 2, 16

    key = jax.random.PRNGKey(0)
    ks = jax.random.split(key, 9)

    # deterministic parameter init (shapes from the module's __init__)
    v1 = 0.01 * jax.random.normal(ks[0], (n_outputs, n_inputs, kernel_size), jnp.float32)
    g1 = 1.0 + 0.1 * jax.random.normal(ks[1], (n_outputs,), jnp.float32)
    b1 = 0.05 * jax.random.normal(ks[2], (n_outputs,), jnp.float32)
    v2 = 0.01 * jax.random.normal(ks[3], (n_outputs, n_outputs, kernel_size), jnp.float32)
    g2 = 1.0 + 0.1 * jax.random.normal(ks[4], (n_outputs,), jnp.float32)
    b2 = 0.05 * jax.random.normal(ks[5], (n_outputs,), jnp.float32)
    wd = 0.01 * jax.random.normal(ks[6], (n_outputs, n_inputs, 1), jnp.float32)
    bd = 0.05 * jax.random.normal(ks[7], (n_outputs,), jnp.float32)

    # weight_norm is applied outside the kernel (parameter setup / glue)
    w1 = weight_norm_effective(v1, g1)
    w2 = weight_norm_effective(v2, g2)
    params = (w1, b1, w2, b2, wd, bd)   # downsample exists since n_inputs != n_outputs

    x = jax.random.normal(jax.random.PRNGKey(42), (N, n_inputs, L), jnp.float32)

    out = temporal_block_forward(x, params, kernel_size=kernel_size,
                                 dilation=dilation, padding=padding, b_tile=1)
    out = jax.block_until_ready(out)
    ref = reference_forward(x, params, kernel_size=kernel_size,
                            dilation=dilation, padding=padding)
    assert out.shape == (N, n_outputs, L), out.shape
    assert jnp.allclose(out, ref, atol=1e-4, rtol=1e-4), \
        float(jnp.max(jnp.abs(out - ref)))

    # second config: no downsample (n_inputs == n_outputs) + batch tile of 2
    v1b = 0.01 * jax.random.normal(ks[8], (n_outputs, n_outputs, kernel_size), jnp.float32)
    w1b = weight_norm_effective(v1b, g1)
    params_nd = (w1b, b1, w2, b2, None, None)
    x2 = jax.random.normal(jax.random.PRNGKey(7), (N, n_outputs, L), jnp.float32)
    out2 = temporal_block_forward(x2, params_nd, kernel_size=kernel_size,
                                  dilation=dilation, padding=padding, b_tile=2)
    out2 = jax.block_until_ready(out2)
    ref2 = reference_forward(x2, params_nd, kernel_size=kernel_size,
                             dilation=dilation, padding=padding)
    assert jnp.allclose(out2, ref2, atol=1e-4, rtol=1e-4), \
        float(jnp.max(jnp.abs(out2 - ref2)))

    print("KERNEL_OK")
</pallas_src>

<mosaic_0001>
module attributes {stable_mosaic.version = 11 : i64} {
  func.func @kernel(%arg0: i32, %arg1: memref<1x4x16xf32, #tpu.memory_space<vmem>>, %arg2: memref<8x12xf32, #tpu.memory_space<vmem>>, %arg3: memref<8x1xf32, #tpu.memory_space<vmem>>, %arg4: memref<8x24xf32, #tpu.memory_space<vmem>>, %arg5: memref<8x1xf32, #tpu.memory_space<vmem>>, %arg6: memref<8x4xf32, #tpu.memory_space<vmem>>, %arg7: memref<8x1xf32, #tpu.memory_space<vmem>>, %arg8: memref<1x8x16xf32, #tpu.memory_space<vmem>>) attributes {dimension_semantics = [#tpu.dimension_semantics<parallel>], iteration_bounds = array<i64: 2>, scalar_prefetch = 0 : i64, scratch_operands = 0 : i64, tpu.core_type = #tpu.core_type<tc>, window_params = [{transform_indices = @transform_0, window_bounds = array<i64: 1, 4, 16>}, {pipeline_mode = #tpu.pipeline_mode<synchronous>, transform_indices = @transform_1, window_bounds = array<i64: 8, 12>}, {pipeline_mode = #tpu.pipeline_mode<synchronous>, transform_indices = @transform_2, window_bounds = array<i64: 8, 1>}, {pipeline_mode = #tpu.pipeline_mode<synchronous>, transform_indices = @transform_3, window_bounds = array<i64: 8, 24>}, {pipeline_mode = #tpu.pipeline_mode<synchronous>, transform_indices = @transform_4, window_bounds = array<i64: 8, 1>}, {pipeline_mode = #tpu.pipeline_mode<synchronous>, transform_indices = @transform_5, window_bounds = array<i64: 8, 4>}, {pipeline_mode = #tpu.pipeline_mode<synchronous>, transform_indices = @transform_6, window_bounds = array<i64: 8, 1>}, {transform_indices = @transform_7, window_bounds = array<i64: 1, 8, 16>}]} {
    %c0 = arith.constant 0 : index
    %c0_0 = arith.constant 0 : index
    %c0_1 = arith.constant 0 : index
    %0 = vector.load %arg1[%c0, %c0_0, %c0_1] : memref<1x4x16xf32, #tpu.memory_space<vmem>>, vector<1x4x16xf32>
    %1 = vector.shape_cast %0 : vector<1x4x16xf32> to vector<4x16xf32>
    %cst = arith.constant 0.000000e+00 : f32
    %2 = vector.broadcast %cst : f32 to vector<4x4xf32>
    %3 = vector.extract_strided_slice %1 {offsets = [0, 0], sizes = [4, 12], strides = [1, 1]} : vector<4x16xf32> to vector<4x12xf32>
    %4 = tpu.concatenate %2, %3 in 1 : vector<4x4xf32>, vector<4x12xf32> -> vector<4x16xf32>
    %cst_2 = arith.constant 0.000000e+00 : f32
    %5 = vector.broadcast %cst_2 : f32 to vector<4x2xf32>
    %6 = vector.extract_strided_slice %1 {offsets = [0, 0], sizes = [4, 14], strides = [1, 1]} : vector<4x16xf32> to vector<4x14xf32>
    %7 = tpu.concatenate %5, %6 in 1 : vector<4x2xf32>, vector<4x14xf32> -> vector<4x16xf32>
    %8 = tpu.concatenate %4, %7, %1 in 0 : vector<4x16xf32>, vector<4x16xf32>, vector<4x16xf32> -> vector<12x16xf32>
    %c0_3 = arith.constant 0 : index
    %c0_4 = arith.constant 0 : index
    %9 = vector.load %arg2[%c0_3, %c0_4] : memref<8x12xf32, #tpu.memory_space<vmem>>, vector<8x12xf32>
    %cst_5 = arith.constant dense<0.000000e+00> : vector<8x16xf32>
    %10 = tpu.matmul %9, %8, %cst_5 {dimension_numbers = #tpu.dot_dimension_numbers<[1], [0], [0], [1], [0, 0, 1, 1], [], []>} : vector<8x12xf32>, vector<12x16xf32>, vector<8x16xf32> -> vector<8x16xf32>
    %c0_6 = arith.constant 0 : index
    %c0_7 = arith.constant 0 : index
    %11 = vector.load %arg3[%c0_6, %c0_7] : memref<8x1xf32, #tpu.memory_space<vmem>>, vector<8x1xf32>
    %12 = vector.broadcast %11 : vector<8x1xf32> to vector<8x16xf32>
    %13 = arith.addf %10, %12 : vector<8x16xf32>
    %cst_8 = arith.constant 0.000000e+00 : f32
    %14 = vector.broadcast %cst_8 : f32 to vector<8x16xf32>
    %15 = arith.maximumf %13, %14 : vector<8x16xf32>
    %cst_9 = arith.constant 0.000000e+00 : f32
    %16 = vector.broadcast %cst_9 : f32 to vector<8x4xf32>
    %17 = vector.extract_strided_slice %15 {offsets = [0, 0], sizes = [8, 12], strides = [1, 1]} : vector<8x16xf32> to vector<8x12xf32>
    %18 = tpu.concatenate %16, %17 in 1 : vector<8x4xf32>, vector<8x12xf32> -> vector<8x16xf32>
    %cst_10 = arith.constant 0.000000e+00 : f32
    %19 = vector.broadcast %cst_10 : f32 to vector<8x2xf32>
    %20 = vector.extract_strided_slice %15 {offsets = [0, 0], sizes = [8, 14], strides = [1, 1]} : vector<8x16xf32> to vector<8x14xf32>
    %21 = tpu.concatenate %19, %20 in 1 : vector<8x2xf32>, vector<8x14xf32> -> vector<8x16xf32>
    %22 = tpu.concatenate %18, %21, %15 in 0 : vector<8x16xf32>, vector<8x16xf32>, vector<8x16xf32> -> vector<24x16xf32>
    %c0_11 = arith.constant 0 : index
    %c0_12 = arith.constant 0 : index
    %23 = vector.load %arg4[%c0_11, %c0_12] : memref<8x24xf32, #tpu.memory_space<vmem>>, vector<8x24xf32>
    %cst_13 = arith.constant dense<0.000000e+00> : vector<8x16xf32>
    %24 = tpu.matmul %23, %22, %cst_13 {dimension_numbers = #tpu.dot_dimension_numbers<[1], [0], [0], [1], [0, 0, 1, 1], [], []>} : vector<8x24xf32>, vector<24x16xf32>, vector<8x16xf32> -> vector<8x16xf32>
    %c0_14 = arith.constant 0 : index
    %c0_15 = arith.constant 0 : index
    %25 = vector.load %arg5[%c0_14, %c0_15] : memref<8x1xf32, #tpu.memory_space<vmem>>, vector<8x1xf32>
    %26 = vector.broadcast %25 : vector<8x1xf32> to vector<8x16xf32>
    %27 = arith.addf %24, %26 : vector<8x16xf32>
    %cst_16 = arith.constant 0.000000e+00 : f32
    %28 = vector.broadcast %cst_16 : f32 to vector<8x16xf32>
    %29 = arith.maximumf %27, %28 : vector<8x16xf32>
    %c0_17 = arith.constant 0 : index
    %c0_18 = arith.constant 0 : index
    %30 = vector.load %arg6[%c0_17, %c0_18] : memref<8x4xf32, #tpu.memory_space<vmem>>, vector<8x4xf32>
    %cst_19 = arith.constant dense<0.000000e+00> : vector<8x16xf32>
    %31 = tpu.matmul %30, %1, %cst_19 {dimension_numbers = #tpu.dot_dimension_numbers<[1], [0], [0], [1], [0, 0, 1, 1], [], []>} : vector<8x4xf32>, vector<4x16xf32>, vector<8x16xf32> -> vector<8x16xf32>
    %c0_20 = arith.constant 0 : index
    %c0_21 = arith.constant 0 : index
    %32 = vector.load %arg7[%c0_20, %c0_21] : memref<8x1xf32, #tpu.memory_space<vmem>>, vector<8x1xf32>
    %33 = vector.broadcast %32 : vector<8x1xf32> to vector<8x16xf32>
    %34 = arith.addf %31, %33 : vector<8x16xf32>
    %35 = arith.addf %29, %34 : vector<8x16xf32>
    %cst_22 = arith.constant 0.000000e+00 : f32
    %36 = vector.broadcast %cst_22 : f32 to vector<8x16xf32>
    %37 = arith.maximumf %35, %36 : vector<8x16xf32>
    %c0_23 = arith.constant 0 : index
    %c0_24 = arith.constant 0 : index
    %c0_25 = arith.constant 0 : index
    %38 = vector.load %arg8[%c0_23, %c0_24, %c0_25] : memref<1x8x16xf32, #tpu.memory_space<vmem>>, vector<1x8x16xf32>
    %39 = vector.shape_cast %38 : vector<1x8x16xf32> to vector<8x16xf32>
    %40 = vector.shape_cast %37 : vector<8x16xf32> to vector<1x8x16xf32>
    tpu.vector_store %arg8[%c0_23, %c0_24, %c0_25], %40 {strides = array<i32>} : memref<1x8x16xf32, #tpu.memory_space<vmem>>, vector<1x8x16xf32>,
    return
  }
  func.func @transform_0(%arg0: i32) -> (i32, i32, i32) {
    %c0_i32 = arith.constant 0 : i32
    %c0_i32_0 = arith.constant 0 : i32
    %c0_i32_1 = arith.constant 0 : i32
    return %arg0, %c0_i32, %c0_i32_0 : i32, i32, i32
  }
  func.func @transform_1(%arg0: i32) -> (i32, i32) {
    %c0_i32 = arith.constant 0 : i32
    %c0_i32_0 = arith.constant 0 : i32
    %c0_i32_1 = arith.constant 0 : i32
    return %c0_i32, %c0_i32_0 : i32, i32
  }
  func.func @transform_2(%arg0: i32) -> (i32, i32) {
    %c0_i32 = arith.constant 0 : i32
    %c0_i32_0 = arith.constant 0 : i32
    %c0_i32_1 = arith.constant 0 : i32
    return %c0_i32, %c0_i32_0 : i32, i32
  }
  func.func @transform_3(%arg0: i32) -> (i32, i32) {
    %c0_i32 = arith.constant 0 : i32
    %c0_i32_0 = arith.constant 0 : i32
    %c0_i32_1 = arith.constant 0 : i32
    return %c0_i32, %c0_i32_0 : i32, i32
  }
  func.func @transform_4(%arg0: i32) -> (i32, i32) {
    %c0_i32 = arith.constant 0 : i32
    %c0_i32_0 = arith.constant 0 : i32
    %c0_i32_1 = arith.constant 0 : i32
    return %c0_i32, %c0_i32_0 : i32, i32
  }
  func.func @transform_5(%arg0: i32) -> (i32, i32) {
    %c0_i32 = arith.constant 0 : i32
    %c0_i32_0 = arith.constant 0 : i32
    %c0_i32_1 = arith.constant 0 : i32
    return %c0_i32, %c0_i32_0 : i32, i32
  }
  func.func @transform_6(%arg0: i32) -> (i32, i32) {
    %c0_i32 = arith.constant 0 : i32
    %c0_i32_0 = arith.constant 0 : i32
    %c0_i32_1 = arith.constant 0 : i32
    return %c0_i32, %c0_i32_0 : i32, i32
  }
  func.func @transform_7(%arg0: i32) -> (i32, i32, i32) {
    %c0_i32 = arith.constant 0 : i32
    %c0_i32_0 = arith.constant 0 : i32
    %c0_i32_1 = arith.constant 0 : i32
    return %arg0, %c0_i32, %c0_i32_0 : i32, i32, i32
  }
}

</mosaic_0001>

<llo_original>
// kernel: tpu_custom_call.1
$region0: #{tpu_custom_call.1}
  #allocation0 [shape = 'u32[]', space=smem, size = 0x4, offset = 0x4, fixed_abs, tag = 'smem constant byte address 0x4 - core index']
  #allocation1 [shape = 'u32[144,128]{1,0:T(1,128)}', space=vmem, size = 0x12000, scoped, tag = 'internal scratch']
  %s0 = inlined_call_operand.vmem [shape: f32[2,4,16], index: 0, kind: input, shape index: {}]
  %s1 = inlined_call_operand.vmem [shape: f32[8,12], index: 1, kind: input, shape index: {}]
  %s2 = inlined_call_operand.vmem [shape: f32[8,1], index: 2, kind: input, shape index: {}]
  %s3 = inlined_call_operand.vmem [shape: f32[8,24], index: 3, kind: input, shape index: {}]
  %s4 = inlined_call_operand.vmem [shape: f32[8,1], index: 4, kind: input, shape index: {}]
  %s5 = inlined_call_operand.vmem [shape: f32[8,4], index: 5, kind: input, shape index: {}]
  %s6 = inlined_call_operand.vmem [shape: f32[8,1], index: 6, kind: input, shape index: {}]
  %s7 = inlined_call_operand.hbm [shape: f32[2,8,16], index: 7, kind: output, shape index: {}]
  %s8 = sld [smem:[#allocation0]]
  $region61: #{tpu_custom_call.1} parent=0
    _
  %s10 = ssub.s32 1, %s8
  %s11 = scalar_select 0, %s10, %s8
  $region1: #{tpu_custom_call.1} parent=0
    #allocation2 [shape = 'u8[8192]{0}', space=vmem, size = 0x2000, scoped, tag = 'output window, operand 0']
    #allocation3 [shape = 's32[2]{0}', space=sflag, size = 0x8, scoped, tag = 'scoped memory for tpu_custom_call.1']
    %12 = vsyncpa [#allocation3], 0
    %s13 = scalar_lea.sflag [#allocation3], 1
    %14 = vsyncpa %s13, 0
    loop: start=0, step=1, limit=4
    $region2: #{tpu_custom_call.1} parent=1 // loop_pre_header
      _
    $region3: #{tpu_custom_call.1} parent=1 // loop_header
      %s16 = sphi 0, %s20
      %p17 = scmp.ge.s32.totalorder %s16, 4
      %s26 = sphi 0, %s28
      %s29 = sphi 0, %s26
      %s30 = sphi 0, %s29
      %s46 = sphi 0, %s30
      %s50 = sphi 0, %s50
      %s52 = sphi 0, %s50
      %s53 = sphi 0, %s52
      %s67 = sphi 0, %s53
      %s71 = sphi 0, %s71
      %s73 = sphi 0, %s71
      %s74 = sphi 0, %s73
      %s88 = sphi 0, %s74
      %s92 = sphi 0, %s92
      %s94 = sphi 0, %s92
      %s95 = sphi 0, %s94
      %s109 = sphi 0, %s95
      %s113 = sphi 0, %s113
      %s115 = sphi 0, %s113
      %s116 = sphi 0, %s115
      %s130 = sphi 0, %s116
      %s134 = sphi 0, %s134
      %s136 = sphi 0, %s134
      %s137 = sphi 0, %s136
      %s151 = sphi 0, %s137
      %s155 = sphi 0, %s155
      %s157 = sphi 0, %s155
      %s158 = sphi 0, %s157
      %s172 = sphi 0, %s158
      %s178 = sphi 0, %s180
      %s181 = sphi 0, %s178
      %s182 = sphi 0, %s181
      %s198 = sphi 0, %s182
    $region4: #{tpu_custom_call.1} parent=1 // loop_header_branch
      %19 = sbr.rel (%p17) target = $region8
    $region5: #{tpu_custom_call.1} parent=1 // loop_body
      %s21 = ssub.s32 %s16, 1
      %s22 = ssub.s32 %s16, 2
      %s23 = sadd.s32 %s16, 1
      %s24 = ssub.s32 %s16, %s23
      %p25 = scmp.eq.s32.totalorder %s24, 0
      %s27 = sadd.s32 %s26, 1
      %s28 = scalar_select %p25, %s26, %s27
      %p31 = pneg %p25
      %p32 = scmp.eq.s32.totalorder %s16, 1
      %p33 = por %p31, %p32
      %p34 = scmp.ne.s32.totalorder %s26, %s29
      %p35 = scmp.eq.s32.totalorder %s16, 0
      %p36 = por %p34, %p35
      %p37 = scmp.ne.s32.totalorder %s26, %s29
      %p38 = scmp.eq.s32.totalorder %s21, 1
      %p39 = por %p37, %p38
      %p40 = scmp.ne.s32.totalorder %s29, %s30
      %p41 = scmp.eq.s32.totalorder %s21, 0
      %p42 = por %p40, %p41
      %p43 = scmp.ne.s32.totalorder %s29, %s30
      %p44 = scmp.eq.s32.totalorder %s22, 1
      %p45 = por %p43, %p44
      %p47 = scmp.ne.s32.totalorder %s30, %s46
      %p48 = scmp.eq.s32.totalorder %s22, 0
      %p49 = por %p47, %p48
      %s51 = sadd.s32 %s50, 1
      %p54 = scmp.eq.s32.totalorder %s16, 1
      %p55 = scmp.ne.s32.totalorder %s50, %s52
      %p56 = scmp.eq.s32.totalorder %s16, 0
      %p57 = por %p55, %p56
      %p58 = scmp.ne.s32.totalorder %s50, %s52
      %p59 = scmp.eq.s32.totalorder %s21, 1
      %p60 = por %p58, %p59
      %p61 = scmp.ne.s32.totalorder %s52, %s53
      %p62 = scmp.eq.s32.totalorder %s21, 0
      %p63 = por %p61, %p62
      %p64 = scmp.ne.s32.totalorder %s52, %s53
      %p65 = scmp.eq.s32.totalorder %s22, 1
      %p66 = por %p64, %p65
      %p68 = scmp.ne.s32.totalorder %s53, %s67
      %p69 = scmp.eq.s32.totalorder %s22, 0
      %p70 = por %p68, %p69
      %s72 = sadd.s32 %s71, 1
      %p75 = scmp.eq.s32.totalorder %s16, 1
      %p76 = scmp.ne.s32.totalorder %s71, %s73
      %p77 = scmp.eq.s32.totalorder %s16, 0
      %p78 = por %p76, %p77
      %p79 = scmp.ne.s32.totalorder %s71, %s73
      %p80 = scmp.eq.s32.totalorder %s21, 1
      %p81 = por %p79, %p80
      %p82 = scmp.ne.s32.totalorder %s73, %s74
      %p83 = scmp.eq.s32.totalorder %s21, 0
      %p84 = por %p82, %p83
      %p85 = scmp.ne.s32.totalorder %s73, %s74
      %p86 = scmp.eq.s32.totalorder %s22, 1
      %p87 = por %p85, %p86
      %p89 = scmp.ne.s32.totalorder %s74, %s88
      %p90 = scmp.eq.s32.totalorder %s22, 0
      %p91 = por %p89, %p90
      %s93 = sadd.s32 %s92, 1
      %p96 = scmp.eq.s32.totalorder %s16, 1
      %p97 = scmp.ne.s32.totalorder %s92, %s94
      %p98 = scmp.eq.s32.totalorder %s16, 0
      %p99 = por %p97, %p98
      %p100 = scmp.ne.s32.totalorder %s92, %s94
      %p101 = scmp.eq.s32.totalorder %s21, 1
      %p102 = por %p100, %p101
      %p103 = scmp.ne.s32.totalorder %s94, %s95
      %p104 = scmp.eq.s32.totalorder %s21, 0
      %p105 = por %p103, %p104
      %p106 = scmp.ne.s32.totalorder %s94, %s95
      %p107 = scmp.eq.s32.totalorder %s22, 1
      %p108 = por %p106, %p107
      %p110 = scmp.ne.s32.totalorder %s95, %s109
      %p111 = scmp.eq.s32.totalorder %s22, 0
      %p112 = por %p110, %p111
      %s114 = sadd.s32 %s113, 1
      %p117 = scmp.eq.s32.totalorder %s16, 1
      %p118 = scmp.ne.s32.totalorder %s113, %s115
      %p119 = scmp.eq.s32.totalorder %s16, 0
      %p120 = por %p118, %p119
      %p121 = scmp.ne.s32.totalorder %s113, %s115
      %p122 = scmp.eq.s32.totalorder %s21, 1
      %p123 = por %p121, %p122
      %p124 = scmp.ne.s32.totalorder %s115, %s116
      %p125 = scmp.eq.s32.totalorder %s21, 0
      %p126 = por %p124, %p125
      %p127 = scmp.ne.s32.totalorder %s115, %s116
      %p128 = scmp.eq.s32.totalorder %s22, 1
      %p129 = por %p127, %p128
      %p131 = scmp.ne.s32.totalorder %s116, %s130
      %p132 = scmp.eq.s32.totalorder %s22, 0
      %p133 = por %p131, %p132
      %s135 = sadd.s32 %s134, 1
      %p138 = scmp.eq.s32.totalorder %s16, 1
      %p139 = scmp.ne.s32.totalorder %s134, %s136
      %p140 = scmp.eq.s32.totalorder %s16, 0
      %p141 = por %p139, %p140
      %p142 = scmp.ne.s32.totalorder %s134, %s136
      %p143 = scmp.eq.s32.totalorder %s21, 1
      %p144 = por %p142, %p143
      %p145 = scmp.ne.s32.totalorder %s136, %s137
      %p146 = scmp.eq.s32.totalorder %s21, 0
      %p147 = por %p145, %p146
      %p148 = scmp.ne.s32.totalorder %s136, %s137
      %p149 = scmp.eq.s32.totalorder %s22, 1
      %p150 = por %p148, %p149
      %p152 = scmp.ne.s32.totalorder %s137, %s151
      %p153 = scmp.eq.s32.totalorder %s22, 0
      %p154 = por %p152, %p153
      %s156 = sadd.s32 %s155, 1
      %p159 = scmp.eq.s32.totalorder %s16, 1
      %p160 = scmp.ne.s32.totalorder %s155, %s157
      %p161 = scmp.eq.s32.totalorder %s16, 0
      %p162 = por %p160, %p161
      %p163 = scmp.ne.s32.totalorder %s155, %s157
      %p164 = scmp.eq.s32.totalorder %s21, 1
      %p165 = por %p163, %p164
      %p166 = scmp.ne.s32.totalorder %s157, %s158
      %p167 = scmp.eq.s32.totalorder %s21, 0
      %p168 = por %p166, %p167
      %p169 = scmp.ne.s32.totalorder %s157, %s158
      %p170 = scmp.eq.s32.totalorder %s22, 1
      %p171 = por %p169, %p170
      %p173 = scmp.ne.s32.totalorder %s158, %s172
      %p174 = scmp.eq.s32.totalorder %s22, 0
      %p175 = por %p173, %p174
      %s176 = ssub.s32 %s16, %s23
      %p177 = scmp.eq.s32.totalorder %s176, 0
      %s179 = sadd.s32 %s178, 1
      %s180 = scalar_select %p177, %s178, %s179
      %p183 = pneg %p177
      %p184 = scmp.eq.s32.totalorder %s16, 1
      %p185 = por %p183, %p184
      %p186 = scmp.ne.s32.totalorder %s178, %s181
      %p187 = scmp.eq.s32.totalorder %s16, 0
      %p188 = por %p186, %p187
      %p189 = scmp.ne.s32.totalorder %s178, %s181
      %p190 = scmp.eq.s32.totalorder %s21, 1
      %p191 = por %p189, %p190
      %p192 = scmp.ne.s32.totalorder %s181, %s182
      %p193 = scmp.eq.s32.totalorder %s21, 0
      %p194 = por %p192, %p193
      %p195 = scmp.ne.s32.totalorder %s181, %s182
      %p196 = scmp.eq.s32.totalorder %s22, 1
      %p197 = por %p195, %p196
      %p199 = scmp.ne.s32.totalorder %s182, %s198
      %p200 = scmp.eq.s32.totalorder %s22, 0
      %p201 = por %p199, %p200
      %p202 = scmp.le.s32.totalorder 1, %s16
      %p203 = scmp.lt.s32.totalorder %s16, 3
      %p204 = pnand %p202, %p203
      %p205 = pneg %p204
      // Predicated region
      $region9: #{tpu_custom_call.1} parent=5 // pred_check
        _
      $region10: #{tpu_custom_call.1} parent=5 // pred_check_branch
        %207 = sbr.rel (%p204) target = $region12
      $region11: #{tpu_custom_call.1} parent=5 // pred_region
        %s208 = ssub.s32 %s16, 1
        // Predicated region
        $region13: #{tpu_custom_call.1} parent=11 // pred_check
          %p209 = pneg %p63
        $region14: #{tpu_custom_call.1} parent=11 // pred_check_branch
          %211 = sbr.rel (%p209) target = $region16
        $region15: #{tpu_custom_call.1} parent=11 // pred_region
          _
        $region16: #{tpu_custom_call.1} parent=11 // pred_fallthru
          _
        // Predicated region
        $region17: #{tpu_custom_call.1} parent=11 // pred_check
          %p212 = pneg %p84
        $region18: #{tpu_custom_call.1} parent=11 // pred_check_branch
          %214 = sbr.rel (%p212) target = $region20
        $region19: #{tpu_custom_call.1} parent=11 // pred_region
          _
        $region20: #{tpu_custom_call.1} parent=11 // pred_fallthru
          _
        // Predicated region
        $region21: #{tpu_custom_call.1} parent=11 // pred_check
          %p215 = pneg %p105
        $region22: #{tpu_custom_call.1} parent=11 // pred_check_branch
          %217 = sbr.rel (%p215) target = $region24
        $region23: #{tpu_custom_call.1} parent=11 // pred_region
          _
        $region24: #{tpu_custom_call.1} parent=11 // pred_fallthru
          _
        // Predicated region
        $region25: #{tpu_custom_call.1} parent=11 // pred_check
          %p218 = pneg %p126
        $region26: #{tpu_custom_call.1} parent=11 // pred_check_branch
          %220 = sbr.rel (%p218) target = $region28
        $region27: #{tpu_custom_call.1} parent=11 // pred_region
          _
        $region28: #{tpu_custom_call.1} parent=11 // pred_fallthru
          _
        // Predicated region
        $region29: #{tpu_custom_call.1} parent=11 // pred_check
          %p221 = pneg %p147
        $region30: #{tpu_custom_call.1} parent=11 // pred_check_branch
          %223 = sbr.rel (%p221) target = $region32
        $region31: #{tpu_custom_call.1} parent=11 // pred_region
          _
        $region32: #{tpu_custom_call.1} parent=11 // pred_fallthru
          _
        // Predicated region
        $region33: #{tpu_custom_call.1} parent=11 // pred_check
          %p224 = pneg %p168
        $region34: #{tpu_custom_call.1} parent=11 // pred_check_branch
          %226 = sbr.rel (%p224) target = $region36
        $region35: #{tpu_custom_call.1} parent=11 // pred_region
          _
        $region36: #{tpu_custom_call.1} parent=11 // pred_fallthru
          _
      $region12: #{tpu_custom_call.1} parent=5 // pred_fallthru
        _
      %p227 = scmp.lt.s32.totalorder %s16, 2
      // Predicated region
      $region37: #{tpu_custom_call.1} parent=5 // pred_check
        %p228 = pneg %p227
      $region38: #{tpu_custom_call.1} parent=5 // pred_check_branch
        %230 = sbr.rel (%p228) target = $region40
      $region39: #{tpu_custom_call.1} parent=5 // pred_region
        // Predicated region
        $region41: #{tpu_custom_call.1} parent=39 // pred_check
          %p231 = pneg %p36
        $region42: #{tpu_custom_call.1} parent=39 // pred_check_branch
          %233 = sbr.rel (%p231) target = $region44
        $region43: #{tpu_custom_call.1} parent=39 // pred_region
          %p234 = scmp.lt.s32.totalorder %s16, 1
          %s235 = scalar_select %p234, %s16, 1
          %s236 = smul.addr %s235, 4
          %s237 = scalar_lea.vmem %s0, %s236
        $region44: #{tpu_custom_call.1} parent=39 // pred_fallthru
          _
      $region40: #{tpu_custom_call.1} parent=5 // pred_fallthru
        _
      %p238 = scmp.le.s32.totalorder 1, %s16
      %p239 = scmp.lt.s32.totalorder %s16, 3
      %p240 = pnand %p238, %p239
      %p241 = pneg %p240
      // Predicated region
      $region45: #{tpu_custom_call.1} parent=5 // pred_check
        _
      $region46: #{tpu_custom_call.1} parent=5 // pred_check_branch
        %243 = sbr.rel (%p240) target = $region48
      $region47: #{tpu_custom_call.1} parent=5 // pred_region
        %s244 = ssub.s32 %s16, 1
        %p245 = scmp.lt.s32.totalorder %s21, 1
        %s246 = scalar_select %p245, %s21, 1
        %s247 = smul.addr %s246, 4
        %s248 = scalar_lea.vmem %s0, %s247
        %p249 = pneg %p42
        %p250 = pneg %p39
        %p251 = pneg %p63
        %p252 = pneg %p60
        %p253 = pneg %p84
        %p254 = pneg %p81
        %p255 = pneg %p105
        %p256 = pneg %p102
        %p257 = pneg %p126
        %p258 = pneg %p123
        %p259 = pneg %p147
        %p260 = pneg %p144
        %p261 = pneg %p168
        %p262 = pneg %p165
        %p263 = pneg %p194
        %p264 = pneg %p191
        %s265 = sand.u32 %s181, 1
        %s266 = scalar_lea.sflag [#allocation3], %s265
        %s267 = sand.u32 %s181, 1
        %s268 = smul.addr %s267, 8
        %s269 = scalar_lea.vmem [#allocation2], %s268
        %p270 = scmp.lt.s32.totalorder %s21, 1
        %s271 = scalar_select %p270, %s21, 1
        %s272 = smul.addr %s271, 4
        %s273 = scalar_lea.vmem %s0, %s272
        %v274 = vld [vmem:[%s273] sm:$0xf]
        %276 = vrot.lane.b32.xlu0 %v274, 4
        %v277 = vpop.permute.xlu0 %276
        %vm279 = vcmask 31744
        %v280 = vsel %vm279, 0.0, %v277
        %281 = vrot.lane.b32.xlu0 %v274, 2
        %v282 = vpop.permute.xlu0 %281
        %vm284 = vcmask 15360
        %v285 = vsel %vm284, 0.0, %v282
        %v287 = vrot.slane %v285, 4
        %vm289 = vcmask 1043456
        %v290 = vsel %vm289, %v280, %v287
        %v291 = vld [vmem:[%s1] sm:$0xff]
        %v292 = vld [vmem:[%s2] sm:$0xff]
        %294 = vset.pattern.permute.xlu0 0
        %295 = vperm.xlu0 %294, %v292
        %v296 = vpop.permute.xlu0 %295
        %vm298 = vcmask 97280
        %v300 = vsel %vm298, %v291, 0
        %v302 = vsel %vm289, %v274, 0
        %304 = vmatprep.subr.mxu0 0.0
        %305 = vmatpush1.msra.mxu0 %v290
        %306 = vmatprep.subr.mxu0 0.0
        %307 = vmatpush1.msra.mxu0 %v302
        %308 = vmatprep.subr.mxu0 0.0
        %309 = vmatpush1.msra.mxu0 0.0
        %310 = vmatprep.subr.mxu0 0.0
        %311 = vmatpush1.msra.mxu0 0.0
        %312 = vmatprep.subr.mxu0 0.0
        %313 = vmatpush1.msra.mxu0 0.0
        %314 = vmatprep.subr.mxu0 0.0
        %315 = vmatpush1.msra.mxu0 0.0
        %316 = vmatprep.subr.mxu0 0.0
        %317 = vmatpush1.msra.mxu0 0.0
        %318 = vmatprep.subr.mxu0 0.0
        %319 = vmatpush1.msra.mxu0 0.0
        %320 = vmatprep.subr.mxu0 0.0
        %321 = vmatpush1.msra.mxu0 0.0
        %322 = vmatprep.subr.mxu0 0.0
        %323 = vmatpush1.msra.mxu0 0.0
        %324 = vmatprep.subr.mxu0 0.0
        %325 = vmatpush1.msra.mxu0 0.0
        %326 = vmatprep.subr.mxu0 0.0
        %327 = vmatpush1.msra.mxu0 0.0
        %328 = vmatprep.subr.mxu0 0.0
        %329 = vmatpush1.msra.mxu0 0.0
        %330 = vmatprep.subr.mxu0 0.0
        %331 = vmatpush1.msra.mxu0 0.0
        %332 = vmatprep.subr.mxu0 0.0
        %333 = vmatpush1.msra.mxu0 0.0
        %334 = vmatprep.subr.mxu0 0.0
        %335 = vmatpush1.msra.mxu0 0.0
        %336 = vmatprep.subr.mxu0 0.0
        %337 = vmatpush1.msra.mxu0 0.0
        %338 = vmatprep.subr.mxu0 0.0
        %339 = vmatpush1.msra.mxu0 0.0
        %340 = vmatprep.subr.mxu0 0.0
        %341 = vmatpush1.msra.mxu0 0.0
        %342 = vmatprep.subr.mxu0 0.0
        %343 = vmatpush1.msra.mxu0 0.0
        %344 = vmatprep.subr.mxu0 0.0
        %345 = vmatpush1.msra.mxu0 0.0
        %346 = vmatprep.subr.mxu0 0.0
        %347 = vmatpush1.msra.mxu0 0.0
        %348 = vmatprep.subr.mxu0 0.0
        %349 = vmatpush1.msra.mxu0 0.0
        %350 = vmatprep.subr.mxu0 0.0
        %351 = vmatpush1.msra.mxu0 0.0
        %352 = vmatprep.subr.mxu0 0.0
        %353 = vmatpush1.msra.mxu0 0.0
        %354 = vmatprep.subr.mxu0 0.0
        %355 = vmatpush1.msra.mxu0 0.0
        %356 = vmatprep.subr.mxu0 0.0
        %357 = vmatpush1.msra.mxu0 0.0
        %358 = vmatprep.subr.mxu0 0.0
        %359 = vmatpush1.msra.mxu0 0.0
        %360 = vmatprep.subr.mxu0 0.0
        %361 = vmatpush1.msra.mxu0 0.0
        %362 = vmatprep.subr.mxu0 0.0
        %363 = vmatpush1.msra.mxu0 0.0
        %364 = vmatprep.subr.mxu0 0.0
        %365 = vmatpush1.msra.mxu0 0.0
        %366 = vmatprep.subr.mxu0 0.0
        %367 = vmatpush1.msra.mxu0 0.0
        %368 = vmatprep.mubr.f32.mxu0 0.0
        %369 = vmatmul.mubr.f32.gmra.mrb[0].mxu0 %v300
        %v370 = vpop.f32.mrb[0].mxu0
        %v371 = vadd.f32 %v296, %v370
        %v372 = vpop.f32.mrb[0].mxu0
        %373 = vdwg.mxu0
        %v374 = vmax.f32 %v371, 0.0
        %376 = vrot.lane.b32.xlu0 %v374, 4
        %v377 = vpop.permute.xlu0 %376
        %v379 = vsel %vm279, 0.0, %v377
        %380 = vrot.lane.b32.xlu0 %v374, 2
        %v381 = vpop.permute.xlu0 %380
        %v383 = vsel %vm284, 0.0, %v381
        %v384 = vld [vmem:[%s3] sm:$0xff]
        %v385 = vld [vmem:[%s4] sm:$0xff]
        %387 = vset.pattern.permute.xlu0 0
        %388 = vperm.xlu0 %387, %v385
        %v389 = vpop.permute.xlu0 %388
        %vm391 = vcmask 195584
        %v393 = vsel %vm391, %v384, 0
        %395 = vmatprep.subr.mxu0 0.0
        %396 = vmatpush1.msra.mxu0 %v379
        %397 = vmatprep.subr.mxu0 0.0
        %398 = vmatpush1.msra.mxu0 %v383
        %399 = vmatprep.subr.mxu0 0.0
        %400 = vmatpush1.msra.mxu0 %v374
        %401 = vmatprep.subr.mxu0 0.0
        %402 = vmatpush1.msra.mxu0 0.0
        %403 = vmatprep.subr.mxu0 0.0
        %404 = vmatpush1.msra.mxu0 0.0
        %405 = vmatprep.subr.mxu0 0.0
        %406 = vmatpush1.msra.mxu0 0.0
        %407 = vmatprep.subr.mxu0 0.0
        %408 = vmatpush1.msra.mxu0 0.0
        %409 = vmatprep.subr.mxu0 0.0
        %410 = vmatpush1.msra.mxu0 0.0
        %411 = vmatprep.subr.mxu0 0.0
        %412 = vmatpush1.msra.mxu0 0.0
        %413 = vmatprep.subr.mxu0 0.0
        %414 = vmatpush1.msra.mxu0 0.0
        %415 = vmatprep.subr.mxu0 0.0
        %416 = vmatpush1.msra.mxu0 0.0
        %417 = vmatprep.subr.mxu0 0.0
        %418 = vmatpush1.msra.mxu0 0.0
        %419 = vmatprep.subr.mxu0 0.0
        %420 = vmatpush1.msra.mxu0 0.0
        %421 = vmatprep.subr.mxu0 0.0
        %422 = vmatpush1.msra.mxu0 0.0
        %423 = vmatprep.subr.mxu0 0.0
        %424 = vmatpush1.msra.mxu0 0.0
        %425 = vmatprep.subr.mxu0 0.0
        %426 = vmatpush1.msra.mxu0 0.0
        %427 = vmatprep.subr.mxu0 0.0
        %428 = vmatpush1.msra.mxu0 0.0
        %429 = vmatprep.subr.mxu0 0.0
        %430 = vmatpush1.msra.mxu0 0.0
        %431 = vmatprep.subr.mxu0 0.0
        %432 = vmatpush1.msra.mxu0 0.0
        %433 = vmatprep.subr.mxu0 0.0
        %434 = vmatpush1.msra.mxu0 0.0
        %435 = vmatprep.subr.mxu0 0.0
        %436 = vmatpush1.msra.mxu0 0.0
        %437 = vmatprep.subr.mxu0 0.0
        %438 = vmatpush1.msra.mxu0 0.0
        %439 = vmatprep.subr.mxu0 0.0
        %440 = vmatpush1.msra.mxu0 0.0
        %441 = vmatprep.subr.mxu0 0.0
        %442 = vmatpush1.msra.mxu0 0.0
        %443 = vmatprep.subr.mxu0 0.0
        %444 = vmatpush1.msra.mxu0 0.0
        %445 = vmatprep.subr.mxu0 0.0
        %446 = vmatpush1.msra.mxu0 0.0
        %447 = vmatprep.subr.mxu0 0.0
        %448 = vmatpush1.msra.mxu0 0.0
        %449 = vmatprep.subr.mxu0 0.0
        %450 = vmatpush1.msra.mxu0 0.0
        %451 = vmatprep.subr.mxu0 0.0
        %452 = vmatpush1.msra.mxu0 0.0
        %453 = vmatprep.subr.mxu0 0.0
        %454 = vmatpush1.msra.mxu0 0.0
        %455 = vmatprep.subr.mxu0 0.0
        %456 = vmatpush1.msra.mxu0 0.0
        %457 = vmatprep.subr.mxu0 0.0
        %458 = vmatpush1.msra.mxu0 0.0
        %459 = vmatprep.mubr.f32.mxu0 0.0
        %460 = vmatmul.mubr.f32.gmra.mrb[0].mxu0 %v393
        %v461 = vpop.f32.mrb[0].mxu0
        %v462 = vadd.f32 %v389, %v461
        %v463 = vpop.f32.mrb[0].mxu0
        %464 = vdwg.mxu0
        %v465 = vmax.f32 %v462, 0.0
        %v466 = vld [vmem:[%s5] sm:$0xff]
        %v467 = vld [vmem:[%s6] sm:$0xff]
        %469 = vset.pattern.permute.xlu0 0
        %470 = vperm.xlu0 %469, %v467
        %v471 = vpop.permute.xlu0 %470
        %v474 = vsel %vm279, %v466, 0
        %476 = vmatprep.subr.mxu0 0.0
        %477 = vmatpush1.msra.mxu0 %v302
        %478 = vmatprep.subr.mxu0 0.0
        %479 = vmatpush1.msra.mxu0 0.0
        %480 = vmatprep.subr.mxu0 0.0
        %481 = vmatpush1.msra.mxu0 0.0
        %482 = vmatprep.subr.mxu0 0.0
        %483 = vmatpush1.msra.mxu0 0.0
        %484 = vmatprep.subr.mxu0 0.0
        %485 = vmatpush1.msra.mxu0 0.0
        %486 = vmatprep.subr.mxu0 0.0
        %487 = vmatpush1.msra.mxu0 0.0
        %488 = vmatprep.subr.mxu0 0.0
        %489 = vmatpush1.msra.mxu0 0.0
        %490 = vmatprep.subr.mxu0 0.0
        %491 = vmatpush1.msra.mxu0 0.0
        %492 = vmatprep.subr.mxu0 0.0
        %493 = vmatpush1.msra.mxu0 0.0
        %494 = vmatprep.subr.mxu0 0.0
        %495 = vmatpush1.msra.mxu0 0.0
        %496 = vmatprep.subr.mxu0 0.0
        %497 = vmatpush1.msra.mxu0 0.0
        %498 = vmatprep.subr.mxu0 0.0
        %499 = vmatpush1.msra.mxu0 0.0
        %500 = vmatprep.subr.mxu0 0.0
        %501 = vmatpush1.msra.mxu0 0.0
        %502 = vmatprep.subr.mxu0 0.0
        %503 = vmatpush1.msra.mxu0 0.0
        %504 = vmatprep.subr.mxu0 0.0
        %505 = vmatpush1.msra.mxu0 0.0
        %506 = vmatprep.subr.mxu0 0.0
        %507 = vmatpush1.msra.mxu0 0.0
        %508 = vmatprep.subr.mxu0 0.0
        %509 = vmatpush1.msra.mxu0 0.0
        %510 = vmatprep.subr.mxu0 0.0
        %511 = vmatpush1.msra.mxu0 0.0
        %512 = vmatprep.subr.mxu0 0.0
        %513 = vmatpush1.msra.mxu0 0.0
        %514 = vmatprep.subr.mxu0 0.0
        %515 = vmatpush1.msra.mxu0 0.0
        %516 = vmatprep.subr.mxu0 0.0
        %517 = vmatpush1.msra.mxu0 0.0
        %518 = vmatprep.subr.mxu0 0.0
        %519 = vmatpush1.msra.mxu0 0.0
        %520 = vmatprep.subr.mxu0 0.0
        %521 = vmatpush1.msra.mxu0 0.0
        %522 = vmatprep.subr.mxu0 0.0
        %523 = vmatpush1.msra.mxu0 0.0
        %524 = vmatprep.subr.mxu0 0.0
        %525 = vmatpush1.msra.mxu0 0.0
        %526 = vmatprep.subr.mxu0 0.0
        %527 = vmatpush1.msra.mxu0 0.0
        %528 = vmatprep.subr.mxu0 0.0
        %529 = vmatpush1.msra.mxu0 0.0
        %530 = vmatprep.subr.mxu0 0.0
        %531 = vmatpush1.msra.mxu0 0.0
        %532 = vmatprep.subr.mxu0 0.0
        %533 = vmatpush1.msra.mxu0 0.0
        %534 = vmatprep.subr.mxu0 0.0
        %535 = vmatpush1.msra.mxu0 0.0
        %536 = vmatprep.subr.mxu0 0.0
        %537 = vmatpush1.msra.mxu0 0.0
        %538 = vmatprep.subr.mxu0 0.0
        %539 = vmatpush1.msra.mxu0 0.0
        %540 = vmatprep.mubr.f32.mxu0 0.0
        %541 = vmatmul.mubr.f32.gmra.mrb[0].mxu0 %v474
        %v542 = vpop.f32.mrb[0].mxu0
        %v543 = vadd.f32 %v471, %v542
        %v544 = vpop.f32.mrb[0].mxu0
        %545 = vdwg.mxu0
        %v546 = vadd.f32 %v465, %v543
        %v547 = vmax.f32 %v546, 0.0
        %vm548 = vcmask 130048
        %549 = vst.msk [vmem:[%s269] sm:$0xff] %vm548, %v547
        %s550 = sand.u32 %s181, 1
        %s551 = scalar_lea.sflag [#allocation3], %s550
        %s552 = sand.u32 %s181, 1
        %s553 = smul.addr %s552, 8
        %s554 = scalar_lea.vmem [#allocation2], %s553
        // Predicated region
        $region49: #{tpu_custom_call.1} parent=47 // pred_check
          %p555 = pneg %p191
        $region50: #{tpu_custom_call.1} parent=47 // pred_check_branch
          %557 = sbr.rel (%p555) target = $region52
        $region51: #{tpu_custom_call.1} parent=47 // pred_region
          %s559 = ssub.s32 128, 128
          %560 = vsyncadd %s551, %s559
          %s561 = smul.addr %s21, 128
          %s562 = scalar_lea.hbm %s7, %s561
          %s564 = sshll.u32 %s554, 4
          %s565 = int_to_ptr.vmem [resolvable:$true] %s564
          %567 = dma.vmem_to_hbm [thread:$0]  %s565, 128, %s562, %s551
        $region52: #{tpu_custom_call.1} parent=47 // pred_fallthru
          _
      $region48: #{tpu_custom_call.1} parent=5 // pred_fallthru
        _
      %p568 = scmp.le.s32.totalorder 2, %s16
      // Predicated region
      $region53: #{tpu_custom_call.1} parent=5 // pred_check
        %p569 = pneg %p568
      $region54: #{tpu_custom_call.1} parent=5 // pred_check_branch
        %571 = sbr.rel (%p569) target = $region56
      $region55: #{tpu_custom_call.1} parent=5 // pred_region
        %s572 = ssub.s32 %s16, 2
        // Predicated region
        $region57: #{tpu_custom_call.1} parent=55 // pred_check
          %p573 = pneg %p197
        $region58: #{tpu_custom_call.1} parent=55 // pred_check_branch
          %575 = sbr.rel (%p573) target = $region60
        $region59: #{tpu_custom_call.1} parent=55 // pred_region
          %s576 = sand.u32 %s182, 1
          %s577 = scalar_lea.sflag [#allocation3], %s576
          %s578 = sand.u32 %s182, 1
          %s579 = smul.addr %s578, 8
          %s580 = scalar_lea.vmem [#allocation2], %s579
          %581 = dma.done %s577, 128
        $region60: #{tpu_custom_call.1} parent=55 // pred_fallthru
          _
      $region56: #{tpu_custom_call.1} parent=5 // pred_fallthru
        _
    $region6: #{tpu_custom_call.1} parent=1 // loop_footer
      %s20 = sadd.s32 1, %s16
    $region7: #{tpu_custom_call.1} parent=1 // loop_footer_branch
      %15 = sbr.rel target = $region3
    $region8: #{tpu_custom_call.1} parent=1 // loop_exit
      _
    %582 = vsyncpa [#allocation3], 1
    %s583 = scalar_lea.sflag [#allocation3], 1
    %584 = vsyncpa %s583, 1

</llo_original>
